<compile_context>
chip_gen: v5e
topology: v5e:2x2
jax: 0.10.0
libtpu: 0.0.40
codegen_flags: <defaults>
</compile_context>

<pallas_src>
import functools

import jax
import jax.numpy as jnp
from jax.experimental import pallas as pl
from jax.experimental.pallas import tpu as pltpu

BN_EPS = 1e-5


# ----------------------------------------------------------------------------
# pltpu.roll direction probe (guards conv orientation against semantics drift)
# ----------------------------------------------------------------------------
_ROLL_SIGN = None


def _roll_probe_kernel(x_ref, o_ref):
    o_ref[...] = pltpu.roll(x_ref[...], 1, axis=1)


def _roll_sign():
    """Sign s so that pltpu.roll(v, (s*off) % n, axis=-1)[..., p] == v[..., (p+off) % n]."""
    global _ROLL_SIGN
    if _ROLL_SIGN is None:
        with jax.ensure_compile_time_eval():
            x = jnp.tile(jax.lax.iota(jnp.int32, 128)[None, :], (8, 1))
            y = pl.pallas_call(
                _roll_probe_kernel,
                out_shape=jax.ShapeDtypeStruct((8, 128), jnp.int32))(x)
            first = int(y[0, 0])
        if first == 127:      # jnp.roll semantics: out[p] = in[p - shift]
            _ROLL_SIGN = -1
        elif first == 1:      # opposite convention: out[p] = in[p + shift]
            _ROLL_SIGN = 1
        else:
            raise RuntimeError(f"unexpected pltpu.roll behaviour: out[0]={first}")
    return _ROLL_SIGN


# ----------------------------------------------------------------------------
# Fused stage kernel: Conv3x3('same') + BN(eval, folded) + ELU + CBAM
# Layout: activations are (C, P) with P = H*W flattened row-major (NCHW order).
# ----------------------------------------------------------------------------
def _stage_kernel(x_ref, wconv_ref, scale_ref, shift_ref,
                  wfc1_ref, bfc1_ref, wfc2_ref, bfc2_ref,
                  wsp_ref, bsp_ref, o_ref, *, cout, img_h, img_w, roll_sign):
    P = img_h * img_w
    x = x_ref[0]                                            # (cin, P) f32

    # Flat-index helpers for boundary masking (img_w is a power of two).
    lane = jax.lax.broadcasted_iota(jnp.int32, (1, P), 1)
    col = jnp.bitwise_and(lane, img_w - 1)

    col_ok, row_ok = {}, {}
    for d in range(-3, 4):
        if d > 0:
            col_ok[d] = col < (img_w - d)
            row_ok[d] = lane < (img_h - d) * img_w
        elif d < 0:
            col_ok[d] = col >= (-d)
            row_ok[d] = lane >= (-d) * img_w
        else:
            col_ok[d] = None
            row_ok[d] = None

    def roll_flat(v, off):
        return pltpu.roll(v, (roll_sign * off) % P, axis=1) if off else v

    def mask(v, m):
        return v if m is None else jnp.where(m, v, 0.0)

    def shifted(v, dy, dx):
        """out[:, y*W+x] = v[:, (y+dy)*W + (x+dx)], zero outside the image."""
        v = roll_flat(v, dy * img_w + dx)
        mr, mc = row_ok[dy], col_ok[dx]
        if mr is not None and mc is not None:
            return jnp.where(jnp.logical_and(mr, mc), v, 0.0)
        return mask(mask(v, mr), mc)

    def shift_cols(v, dx):
        """out[:, y*W+x] = v[:, y*W + (x+dx)], zero where x+dx leaves [0, W)."""
        return mask(roll_flat(v, dx), col_ok[dx])

    def shift_rows(v, dy):
        """out[:, y*W+x] = v[:, (y+dy)*W + x], zero where y+dy leaves [0, H)."""
        return mask(roll_flat(v, dy * img_w), row_ok[dy])

    # --- Conv2d 3x3 padding='same' (cross-correlation) + folded BatchNorm + ELU
    acc = jnp.zeros((cout, P), jnp.float32)
    for dy in (-1, 0, 1):
        for dx in (-1, 0, 1):
            t = (dy + 1) * 3 + (dx + 1)
            acc = acc + jnp.dot(wconv_ref[t], shifted(x, dy, dx),
                                preferred_element_type=jnp.float32)
    y = acc * scale_ref[...] + shift_ref[...]               # (cout, P)
    y = jnp.where(y > 0, y, jnp.exp(jnp.minimum(y, 0.0)) - 1.0)   # ELU(alpha=1)

    # --- CBAM channel attention: sigmoid(MLP(avgpool) + MLP(maxpool))
    def mlp(v):                                             # v: (cout, 1)
        h = jnp.dot(wfc1_ref[...], v, preferred_element_type=jnp.float32) + bfc1_ref[...]
        h = jnp.maximum(h, 0.0)
        return jnp.dot(wfc2_ref[...], h, preferred_element_type=jnp.float32) + bfc2_ref[...]

    avg_c = jnp.mean(y, axis=1, keepdims=True)              # (cout, 1)
    max_c = jnp.max(y, axis=1, keepdims=True)
    gate_c = mlp(avg_c) + mlp(max_c)
    gate_c = 1.0 / (1.0 + jnp.exp(-gate_c))
    y = y * gate_c

    # --- CBAM spatial attention: sigmoid(conv7x7([mean_c, max_c], pad=3))
    avg_s = jnp.mean(y, axis=0, keepdims=True)              # (1, P)
    max_s = jnp.max(y, axis=0, keepdims=True)

    # Decomposed tap shifts: 12 column rolls shared across all kernel rows,
    # VPU weight fold, then 6 row rolls of the per-row partial sums
    # (vs 48 combined full-image rolls).  Masks commute with the row roll.
    row_sum = [None] * 7                                    # indexed by dy + 3
    for dx in range(-3, 4):
        a_dx = shift_cols(avg_s, dx)
        m_dx = shift_cols(max_s, dx)
        for dy in range(-3, 4):
            t = (dy + 3) * 7 + (dx + 3)
            contrib = wsp_ref[0, t] * a_dx + wsp_ref[1, t] * m_dx
            j = dy + 3
            row_sum[j] = contrib if row_sum[j] is None else row_sum[j] + contrib

    sp = jnp.zeros((1, P), jnp.float32) + bsp_ref[0]
    for dy in range(-3, 4):
        sp = sp + shift_rows(row_sum[dy + 3], dy)
    gate_s = pl.reciprocal(1.0 + jnp.exp(-sp), approx=True)

    o_ref[0] = y * gate_s


def _run_stage(x_flat, sp, img_h, img_w):
    B, cin, P = x_flat.shape
    assert P == img_h * img_w
    assert img_w & (img_w - 1) == 0, "W must be a power of two (mask trick)"
    cout = sp["wconv"].shape[1]
    cr = sp["wfc1"].shape[0]

    kernel = functools.partial(_stage_kernel, cout=cout, img_h=img_h,
                               img_w=img_w, roll_sign=_roll_sign())

    def full(shape):
        return pl.BlockSpec(shape, lambda *_: (0,) * len(shape))

    return pl.pallas_call(
        kernel,
        out_shape=jax.ShapeDtypeStruct((B, cout, P), jnp.float32),
        grid=(B,),
        in_specs=[
            pl.BlockSpec((1, cin, P), lambda b: (b, 0, 0)),
            full((9, cout, cin)),
            full((cout, 1)),
            full((cout, 1)),
            full((cr, cout)),
            full((cr, 1)),
            full((cout, cr)),
            full((cout, 1)),
            pl.BlockSpec(memory_space=pltpu.MemorySpace.SMEM),   # wsp (2, 49)
            pl.BlockSpec(memory_space=pltpu.MemorySpace.SMEM),   # bsp (1,)
        ],
        out_specs=pl.BlockSpec((1, cout, P), lambda b: (b, 0, 0)),
        compiler_params=pltpu.CompilerParams(
            dimension_semantics=("parallel",)),
    )(x_flat, sp["wconv"], sp["scale"], sp["shift"], sp["wfc1"], sp["bfc1"],
      sp["wfc2"], sp["bfc2"], sp["wsp"], sp["bsp"])


# ----------------------------------------------------------------------------
# Fused classifier kernel: Linear(8192,128) -> ELU -> Linear(128,NW) -> log_softmax
# W1 is bf16 and fully VMEM-resident (no K tiling); accumulation is f32.
# ----------------------------------------------------------------------------
def _classifier_kernel(feat_ref, w1_ref, b1_ref, w2_ref, b2_ref, out_ref):
    h = jnp.dot(feat_ref[...].astype(jnp.bfloat16), w1_ref[...],
                preferred_element_type=jnp.float32) + b1_ref[...]
    h = jnp.where(h > 0, h, jnp.exp(jnp.minimum(h, 0.0)) - 1.0)        # ELU
    logits = jnp.dot(h, w2_ref[...],
                     preferred_element_type=jnp.float32) + b2_ref[...]
    m = jnp.max(logits, axis=-1, keepdims=True)
    lse = m + jnp.log(jnp.sum(jnp.exp(logits - m), axis=-1, keepdims=True))
    out_ref[...] = logits - lse


def _run_classifier(feat, w1_bf16, b1, w2, b2):
    B = feat.shape[0]
    nw = w2.shape[1]
    return pl.pallas_call(
        _classifier_kernel,
        out_shape=jax.ShapeDtypeStruct((B, nw), jnp.float32),
    )(feat, w1_bf16, b1, w2, b2)


# ----------------------------------------------------------------------------
# Plain-JAX glue: 2x2 stride-2 pooling between the Pallas stage kernels.
# ----------------------------------------------------------------------------
def _pool2x2(x_flat, c, img_h, img_w, red):
    B = x_flat.shape[0]
    x = x_flat.reshape(B, c, img_h // 2, 2, img_w // 2, 2)
    return red(x, axis=(3, 5)).reshape(B, c, (img_h // 2) * (img_w // 2))


# ----------------------------------------------------------------------------
# Full forward (eval mode; Dropout is identity).  Wrap in jax.jit at call site.
# ----------------------------------------------------------------------------
def real_convnet_cbam_forward(x, params):
    B, cin, img_h, img_w = x.shape
    y = x.reshape(B, cin, img_h * img_w)
    for i, pool in ((1, "max"), (2, "max"), (3, "avg")):
        sp = params[f"stage{i}"]
        y = _run_stage(y, sp, img_h, img_w)
        cout = sp["wconv"].shape[1]
        red = jnp.max if pool == "max" else jnp.mean
        y = _pool2x2(y, cout, img_h, img_w, red)
        img_h //= 2
        img_w //= 2
    feat = y.reshape(B, -1)          # nn.Flatten (NCHW order); Dropout = identity
    return _run_classifier(feat, params["w1"], params["b1"],
                           params["w2"], params["b2"])


# ----------------------------------------------------------------------------
# Parameters (raw = PyTorch-like layout) and kernel-layout preparation
# ----------------------------------------------------------------------------
def init_raw_params(key, number_waveforms):
    hidden = int(128 * number_waveforms / 8)
    kdim = 32 * 16 * 16
    keys = iter(jax.random.split(key, 48))

    def nrm(shape, scale):
        return scale * jax.random.normal(next(keys), shape, jnp.float32)

    def stage(ci, co):
        cr = co // 2
        return {
            "conv_w": nrm((co, ci, 3, 3), (2.0 / (ci * 9)) ** 0.5),
            "conv_b": nrm((co,), 0.05),
            "bn_gamma": 1.0 + nrm((co,), 0.1),
            "bn_beta": nrm((co,), 0.1),
            "bn_mean": nrm((co,), 0.1),
            "bn_var": jax.random.uniform(next(keys), (co,), jnp.float32, 0.5, 1.5),
            "fc1_w": nrm((cr, co), co ** -0.5),
            "fc1_b": nrm((cr,), 0.05),
            "fc2_w": nrm((co, cr), cr ** -0.5),
            "fc2_b": nrm((co,), 0.05),
            "sp_w": nrm((1, 2, 7, 7), (2.0 / 98.0) ** 0.5),
            "sp_b": nrm((1,), 0.05),
        }

    return {
        "stage1": stage(2, 8),
        "stage2": stage(8, 16),
        "stage3": stage(16, 32),
        "fc_a_w": nrm((hidden, kdim), kdim ** -0.5),
        "fc_a_b": nrm((hidden,), 0.05),
        "fc_b_w": nrm((number_waveforms, hidden), hidden ** -0.5),
        "fc_b_b": nrm((number_waveforms,), 0.05),
    }


def _prep_stage(sp):
    co, ci = sp["conv_w"].shape[0], sp["conv_w"].shape[1]
    inv_std = 1.0 / jnp.sqrt(sp["bn_var"] + BN_EPS)
    scale = sp["bn_gamma"] * inv_std
    shift = sp["bn_beta"] + (sp["conv_b"] - sp["bn_mean"]) * scale
    return {
        # tap-major conv weight: wconv[(ky*3+kx), co, ci] = conv_w[co, ci, ky, kx]
        "wconv": jnp.transpose(sp["conv_w"], (2, 3, 0, 1)).reshape(9, co, ci),
        "scale": scale.reshape(co, 1),
        "shift": shift.reshape(co, 1),
        "wfc1": sp["fc1_w"],
        "bfc1": sp["fc1_b"].reshape(-1, 1),
        "wfc2": sp["fc2_w"],
        "bfc2": sp["fc2_b"].reshape(-1, 1),
        "wsp": sp["sp_w"][0].reshape(2, 49),   # [channel(mean,max), ky*7+kx]
        "bsp": sp["sp_b"],
    }


def prepare_kernel_params(raw):
    _roll_sign()   # resolve pltpu.roll orientation eagerly, before any jit trace
    p = {f"stage{i}": _prep_stage(raw[f"stage{i}"]) for i in (1, 2, 3)}
    # Linear weights stored transposed (in, out); W1 stored in bf16 (perf).
    p["w1"] = jnp.transpose(raw["fc_a_w"]).astype(jnp.bfloat16)
    p["b1"] = raw["fc_a_b"].reshape(1, -1)
    p["w2"] = jnp.transpose(raw["fc_b_w"])
    p["b2"] = raw["fc_b_b"].reshape(1, -1)
    return p


# ----------------------------------------------------------------------------
# Pure-JAX reference (built from the raw PyTorch-layout params)
# ----------------------------------------------------------------------------
def reference_forward(x, raw):
    def elu(v):
        return jnp.where(v > 0, v, jnp.expm1(v))

    def conv(v, w, b):
        out = jax.lax.conv_general_dilated(
            v, w, window_strides=(1, 1), padding="SAME",
            dimension_numbers=("NCHW", "OIHW", "NCHW"),
            precision=jax.lax.Precision.HIGHEST)
        return out + b[None, :, None, None]

    def stage(v, sp):
        y = conv(v, sp["conv_w"], sp["conv_b"])
        s = sp["bn_gamma"] / jnp.sqrt(sp["bn_var"] + BN_EPS)
        y = s[None, :, None, None] * (y - sp["bn_mean"][None, :, None, None]) \
            + sp["bn_beta"][None, :, None, None]
        y = elu(y)
        avg = jnp.mean(y, axis=(2, 3))
        mx = jnp.max(y, axis=(2, 3))

        def mlp(v2):
            h = jnp.maximum(v2 @ sp["fc1_w"].T + sp["fc1_b"], 0.0)
            return h @ sp["fc2_w"].T + sp["fc2_b"]

        g = jax.nn.sigmoid(mlp(avg) + mlp(mx))
        y = y * g[:, :, None, None]
        m = jnp.concatenate([jnp.mean(y, axis=1, keepdims=True),
                             jnp.max(y, axis=1, keepdims=True)], axis=1)
        a = conv(m, sp["sp_w"], sp["sp_b"])
        return y * jax.nn.sigmoid(a)

    def pool(v, red):
        B, C, H, W = v.shape
        return red(v.reshape(B, C, H // 2, 2, W // 2, 2), axis=(3, 5))

    y = pool(stage(x, raw["stage1"]), jnp.max)
    y = pool(stage(y, raw["stage2"]), jnp.max)
    y = pool(stage(y, raw["stage3"]), jnp.mean)
    B = x.shape[0]
    feat = y.reshape(B, -1)
    # Match the kernel's bf16 W1 / bf16 activations with f32 accumulation.
    w1 = raw["fc_a_w"].T.astype(jnp.bfloat16).astype(jnp.float32)
    featq = feat.astype(jnp.bfloat16).astype(jnp.float32)
    h = elu(jnp.dot(featq, w1, precision=jax.lax.Precision.HIGHEST) + raw["fc_a_b"])
    logits = jnp.dot(h, raw["fc_b_w"].T,
                     precision=jax.lax.Precision.HIGHEST) + raw["fc_b_b"]
    return jax.nn.log_softmax(logits, axis=1)


# ----------------------------------------------------------------------------
if __name__ == "__main__":
    number_waveforms = 8
    B, Cin, H, W = 2, 2, 128, 128        # 128x128 input => 16x16 after 3 poolings

    key = jax.random.PRNGKey(0)
    raw = init_raw_params(key, number_waveforms)
    kernel_params = prepare_kernel_params(raw)   # also resolves roll sign eagerly
    x = jax.random.normal(jax.random.fold_in(key, 999), (B, Cin, H, W), jnp.float32)

    forward = jax.jit(real_convnet_cbam_forward)
    out = jax.block_until_ready(forward(x, kernel_params))

    assert out.shape == (B, number_waveforms)
    assert bool(jnp.all(jnp.isfinite(out)))
    assert bool(jnp.allclose(jnp.sum(jnp.exp(out), axis=1), 1.0, atol=1e-4))

    ref = reference_forward(x, raw)
    err = float(jnp.max(jnp.abs(out - ref)))
    assert err < 1e-1, f"kernel/reference mismatch: max abs err {err}"

    print("KERNEL_OK")
</pallas_src>

<mosaic_0001>
module attributes {stable_mosaic.version = 11 : i64} {
  func.func @_roll_probe_kernel(%arg0: memref<8x128xi32, #tpu.memory_space<vmem>>, %arg1: memref<8x128xi32, #tpu.memory_space<vmem>>) attributes {dimension_semantics = [], scalar_prefetch = 0 : i64, scratch_operands = 0 : i64, tpu.core_type = #tpu.core_type<tc>} {
    %c0 = arith.constant 0 : index
    %c0_0 = arith.constant 0 : index
    %0 = vector.load %arg0[%c0, %c0_0] : memref<8x128xi32, #tpu.memory_space<vmem>>, vector<8x128xi32>
    %c1_i32 = arith.constant 1 : i32
    %1 = tpu.dynamic_rotate %0 by %c1_i32 dim 1 : vector<8x128xi32>, i32 -> vector<8x128xi32>
    %c0_1 = arith.constant 0 : index
    %c0_2 = arith.constant 0 : index
    %2 = vector.load %arg1[%c0_1, %c0_2] : memref<8x128xi32, #tpu.memory_space<vmem>>, vector<8x128xi32>
    tpu.vector_store %arg1[%c0_1, %c0_2], %1 {strides = array<i32>} : memref<8x128xi32, #tpu.memory_space<vmem>>, vector<8x128xi32>,
    return
  }
}

</mosaic_0001>

<llo_original>
// kernel: tpu_custom_call.1
$region0: #{tpu_custom_call.1}
  #allocation0 [shape = 'u32[]', space=smem, size = 0x4, offset = 0x4, fixed_abs, tag = 'smem constant byte address 0x4 - core index']
  #allocation1 [shape = 'u32[72,128]{1,0:T(1,128)}', space=vmem, size = 0x9000, scoped, tag = 'internal scratch']
  %s0 = inlined_call_operand.hbm [shape: s32[8,128], index: 0, kind: input, shape index: {}]
  %s1 = inlined_call_operand.hbm [shape: s32[8,128], index: 1, kind: output, shape index: {}]
  %s2 = sld [smem:[#allocation0]]
  $region18: #{tpu_custom_call.1} parent=0
    _
  %s4 = ssub.s32 1, %s2
  %s5 = scalar_select 0, %s4, %s2
  $region1: #{tpu_custom_call.1} parent=0
    #allocation2 [shape = 'u8[4096]{0}', space=vmem, size = 0x1000, scoped, tag = 'input window, operand 0, single buffered']
    #allocation3 [shape = 's32[1]{0}', space=sflag, size = 0x4, scoped, tag = 'scoped memory for tpu_custom_call.1']
    #allocation4 [shape = 's32[1]{0}', space=sflag, size = 0x4, scoped, tag = 'scoped memory for tpu_custom_call.1']
    #allocation5 [shape = 'u8[4096]{0}', space=vmem, size = 0x1000, scoped, tag = 'output window, operand 0, single buffered']
    %6 = vsyncpa [#allocation3], 0
    %7 = vsyncpa [#allocation4], 0
    // Predicated region
    $region2: #{tpu_custom_call.1} parent=1 // pred_check
      _
    $region3: #{tpu_custom_call.1} parent=1 // pred_check_branch
      %9 = sbr.rel (0) target = $region5
    $region4: #{tpu_custom_call.1} parent=1 // pred_region
      %11 = vsyncadd [#allocation3], 0
      %s13 = sshll.u32 %s0, 4
      %s14 = int_to_ptr.hbm [resolvable:$true] %s13
      %s15 = sshll.u32 [#allocation2], 4
      %s16 = int_to_ptr.vmem [resolvable:$true] %s15
      %18 = dma.hbm_to_vmem [thread:$0]  %s14, 128, %s16, [#allocation3]
    $region5: #{tpu_custom_call.1} parent=1 // pred_fallthru
      _
    // Predicated region
    $region6: #{tpu_custom_call.1} parent=1 // pred_check
      _
    $region7: #{tpu_custom_call.1} parent=1 // pred_check_branch
      %20 = sbr.rel (0) target = $region9
    $region8: #{tpu_custom_call.1} parent=1 // pred_region
      %22 = dma.done [#allocation3], 128
    $region9: #{tpu_custom_call.1} parent=1 // pred_fallthru
      _
    %v23 = vld [vmem:[#allocation2] sm:$0xff]
    %24 = vrot.lane.b32.xlu0 %v23, 1
    %v25 = vpop.permute.xlu0 %24
    %26 = vst [vmem:[#allocation5] sm:$0xff] %v25
    // Predicated region
    $region10: #{tpu_custom_call.1} parent=1 // pred_check
      _
    $region11: #{tpu_custom_call.1} parent=1 // pred_check_branch
      %28 = sbr.rel (0) target = $region13
    $region12: #{tpu_custom_call.1} parent=1 // pred_region
      %30 = vsyncadd [#allocation4], 0
      %s32 = sshll.u32 [#allocation5], 4
      %s33 = int_to_ptr.vmem [resolvable:$true] %s32
      %s34 = sshll.u32 %s1, 4
      %s35 = int_to_ptr.hbm [resolvable:$true] %s34
      %37 = dma.vmem_to_hbm [thread:$0]  %s33, 128, %s35, [#allocation4]
    $region13: #{tpu_custom_call.1} parent=1 // pred_fallthru
      _
    // Predicated region
    $region14: #{tpu_custom_call.1} parent=1 // pred_check
      _
    $region15: #{tpu_custom_call.1} parent=1 // pred_check_branch
      %39 = sbr.rel (0) target = $region17
    $region16: #{tpu_custom_call.1} parent=1 // pred_region
      %41 = dma.done [#allocation4], 128
    $region17: #{tpu_custom_call.1} parent=1 // pred_fallthru
      _
    %42 = vsyncpa [#allocation3], 1
    %43 = vsyncpa [#allocation4], 1

</llo_original>
